<compile_context>
chip_gen: v5e
topology: v5e:2x2
jax: 0.10.0
libtpu: 0.0.40
codegen_flags: <defaults>
</compile_context>

<pallas_src>
import functools

import jax
import jax.numpy as jnp
from jax import lax
from jax.experimental import pallas as pl
from jax.experimental.pallas import tpu as pltpu

_EPS = 1e-8  # PyTorch cosine_similarity default eps
_LANE = 128


def _normal_degree_mse_kernel(pred_ref, gt_ref, out_ref, acc_ref, *,
                              valid_last, has_pad):
    # pred_ref / gt_ref: (C, r_tile, 128)   out_ref: (1, 128)
    # acc_ref (scratch): (r_tile, 128) f32 per-lane partial sums.
    j = pl.program_id(1)
    nj = pl.num_programs(1)
    C = pred_ref.shape[0]

    @pl.when(j == 0)
    def _():
        acc_ref[...] = jnp.zeros_like(acc_ref)

    # Unrolled channel reduction over dense (r_tile, 128) slabs (pure VPU).
    p0 = pred_ref[0].astype(jnp.float32)
    g0 = gt_ref[0].astype(jnp.float32)
    dot = p0 * g0
    pp = p0 * p0
    gg = g0 * g0
    for c in range(1, C):
        pc = pred_ref[c].astype(jnp.float32)
        gc = gt_ref[c].astype(jnp.float32)
        dot = dot + pc * gc
        pp = pp + pc * pc
        gg = gg + gc * gc

    # cos = dot / max(|p|*|g|, eps)  ==  dot * rsqrt(max(|p|^2*|g|^2, eps^2))
    cos = dot * lax.rsqrt(jnp.maximum(pp * gg, jnp.float32(_EPS * _EPS)))
    e = 1.0 - jnp.clip(cos, -1.0, 1.0)
    e2 = e * e                                            # (r_tile, 128)

    if has_pad:
        # Only the very last point-tile contains padded (zero) points.
        @pl.when(j != nj - 1)
        def _():
            acc_ref[...] += e2

        @pl.when(j == nj - 1)
        def _():
            row = lax.broadcasted_iota(jnp.int32, e2.shape, 0)
            lane = lax.broadcasted_iota(jnp.int32, e2.shape, 1)
            idx = row * e2.shape[1] + lane                # point index in block
            acc_ref[...] += jnp.where(idx < valid_last, e2, 0.0)
    else:
        acc_ref[...] += e2

    @pl.when(j == nj - 1)
    def _():
        # Single cross-sublane reduction, once per image.
        out_ref[...] = jnp.sum(acc_ref[...], axis=0, keepdims=True)


def _pick_r_tile(R, C, itemsize, max_r_tile):
    """Rows-of-128 per block: big enough to amortize grid-step overhead,
    small enough that 2 inputs x 2 pipeline buffers fit VMEM on v7x too."""
    vmem_budget = 12 * 1024 * 1024                 # bytes for pipelined inputs
    per_row = 4 * C * _LANE * itemsize             # 2 inputs x 2 buffers
    cap = min(int(max_r_tile), vmem_budget // per_row)
    cap = max(8, (cap // 8) * 8)
    if R <= cap:
        return R                                    # single block: full dim OK
    # Prefer a divisor of R (multiple of 8, >=128 rows) to avoid any padding.
    for t in range(cap, 127, -8):
        if R % t == 0:
            return t
    return cap


def normal_degree_mse_loss(pred, gt, *, max_r_tile=1024):
    """Pallas implementation of NormalDegreeMSELoss.forward for NCHW inputs."""
    assert pred.shape == gt.shape
    N, C, H, W = pred.shape
    P = H * W

    itemsize = jnp.dtype(pred.dtype).itemsize
    R = pl.cdiv(P, _LANE)
    r_tile = _pick_r_tile(R, C, itemsize, max_r_tile)
    J = pl.cdiv(R, r_tile)
    R_pad = J * r_tile
    P_pad = R_pad * _LANE

    # Free reshape (no data movement) to (N, C, P); pad only if P doesn't tile.
    pred3 = pred.reshape(N, C, P)
    gt3 = gt.reshape(N, C, P)
    if P_pad != P:
        pad = P_pad - P
        pred3 = jnp.pad(pred3, ((0, 0), (0, 0), (0, pad)))
        gt3 = jnp.pad(gt3, ((0, 0), (0, 0), (0, pad)))
    pred4 = pred3.reshape(N, C, R_pad, _LANE)
    gt4 = gt3.reshape(N, C, R_pad, _LANE)

    valid_last = P - (J - 1) * r_tile * _LANE      # valid points in last block
    kernel = functools.partial(_normal_degree_mse_kernel,
                               valid_last=valid_last,
                               has_pad=(P_pad != P))

    partials = pl.pallas_call(
        kernel,
        out_shape=jax.ShapeDtypeStruct((N, 1, _LANE), jnp.float32),
        grid_spec=pltpu.PrefetchScalarGridSpec(
            num_scalar_prefetch=0,
            grid=(N, J),
            in_specs=[
                pl.BlockSpec((None, C, r_tile, _LANE),
                             lambda n, j: (n, 0, j, 0)),
                pl.BlockSpec((None, C, r_tile, _LANE),
                             lambda n, j: (n, 0, j, 0)),
            ],
            out_specs=pl.BlockSpec((None, 1, _LANE),
                                   lambda n, j: (n, 0, 0)),
            scratch_shapes=[pltpu.VMEM((r_tile, _LANE), jnp.float32)],
        ),
        compiler_params=pltpu.CompilerParams(
            dimension_semantics=("parallel", "arbitrary")),
    )(pred4, gt4)

    return jnp.sum(partials) / jnp.float32(N * P)


def _reference(pred, gt):
    """Pure-JAX reference mirroring the PyTorch module."""
    dot = jnp.sum(pred * gt, axis=1)
    n_p = jnp.sqrt(jnp.sum(pred * pred, axis=1))
    n_g = jnp.sqrt(jnp.sum(gt * gt, axis=1))
    cos = dot / jnp.maximum(n_p * n_g, _EPS)
    e = 1.0 - jnp.clip(cos, -1.0, 1.0)
    return jnp.mean(e * e)


if __name__ == "__main__":
    key = jax.random.PRNGKey(0)
    k1, k2, k3, k4 = jax.random.split(key, 4)

    # Test 1: canonical small NCHW shape (single tile, no padding).
    N, C, H, W = 2, 4, 16, 16
    pred = jax.random.normal(k1, (N, C, H, W), dtype=jnp.float32)
    gt = jax.random.normal(k2, (N, C, H, W), dtype=jnp.float32)
    loss = jax.block_until_ready(normal_degree_mse_loss(pred, gt))
    ref = jax.block_until_ready(_reference(pred, gt))
    assert jnp.allclose(loss, ref, rtol=1e-5, atol=1e-5), (loss, ref)

    # Test 2: exercises multi-tile grid, padding and the last-block mask.
    N2, C2, H2, W2 = 2, 3, 32, 36
    pred2 = jax.random.normal(k3, (N2, C2, H2, W2), dtype=jnp.float32)
    gt2 = jax.random.normal(k4, (N2, C2, H2, W2), dtype=jnp.float32)
    loss2 = jax.block_until_ready(
        normal_degree_mse_loss(pred2, gt2, max_r_tile=8))
    ref2 = jax.block_until_ready(_reference(pred2, gt2))
    assert jnp.allclose(loss2, ref2, rtol=1e-5, atol=1e-5), (loss2, ref2)

    print("KERNEL_OK")
</pallas_src>

<mosaic_0001>
module attributes {stable_mosaic.version = 11 : i64} {
  func.func @_normal_degree_mse_kernel(%arg0: i32, %arg1: i32, %arg2: memref<1x4x2x128xf32, #tpu.memory_space<vmem>>, %arg3: memref<1x4x2x128xf32, #tpu.memory_space<vmem>>, %arg4: memref<1x1x128xf32, #tpu.memory_space<vmem>>, %arg5: memref<2x128xf32, #tpu.memory_space<vmem>>) attributes {dimension_semantics = [#tpu.dimension_semantics<parallel>, #tpu.dimension_semantics<arbitrary>], iteration_bounds = array<i64: 2, 1>, scalar_prefetch = 0 : i64, scratch_operands = 1 : i64, tpu.core_type = #tpu.core_type<tc>, window_params = [{transform_indices = @transform_0, window_bounds = array<i64: 1, 4, 2, 128>}, {transform_indices = @transform_1, window_bounds = array<i64: 1, 4, 2, 128>}, {transform_indices = @transform_2, window_bounds = array<i64: 1, 1, 128>}]} {
    %c0_i32 = arith.constant 0 : i32
    %0 = arith.cmpi eq, %arg1, %c0_i32 : i32
    %1 = arith.extui %0 : i1 to i32
    %c0_i32_0 = arith.constant 0 : i32
    %2 = arith.cmpi ne, %1, %c0_i32_0 : i32
    scf.if %2 {
      %cst_38 = arith.constant 0.000000e+00 : f32
      %58 = vector.broadcast %cst_38 : f32 to vector<2x128xf32>
      %c0_39 = arith.constant 0 : index
      %c0_40 = arith.constant 0 : index
      %59 = vector.load %arg5[%c0_39, %c0_40] : memref<2x128xf32, #tpu.memory_space<vmem>>, vector<2x128xf32>
      tpu.vector_store %arg5[%c0_39, %c0_40], %58 {strides = array<i32>} : memref<2x128xf32, #tpu.memory_space<vmem>>, vector<2x128xf32>,
    } else {
    }
    %c0 = arith.constant 0 : index
    %c0_1 = arith.constant 0 : index
    %c0_2 = arith.constant 0 : index
    %c0_3 = arith.constant 0 : index
    %3 = vector.load %arg2[%c0, %c0_1, %c0_2, %c0_3] : memref<1x4x2x128xf32, #tpu.memory_space<vmem>>, vector<1x1x2x128xf32>
    %4 = vector.shape_cast %3 : vector<1x1x2x128xf32> to vector<2x128xf32>
    %c0_4 = arith.constant 0 : index
    %c0_5 = arith.constant 0 : index
    %c0_6 = arith.constant 0 : index
    %c0_7 = arith.constant 0 : index
    %5 = vector.load %arg3[%c0_4, %c0_5, %c0_6, %c0_7] : memref<1x4x2x128xf32, #tpu.memory_space<vmem>>, vector<1x1x2x128xf32>
    %6 = vector.shape_cast %5 : vector<1x1x2x128xf32> to vector<2x128xf32>
    %7 = arith.mulf %4, %6 : vector<2x128xf32>
    %8 = arith.mulf %4, %4 : vector<2x128xf32>
    %9 = arith.mulf %6, %6 : vector<2x128xf32>
    %c0_8 = arith.constant 0 : index
    %c1 = arith.constant 1 : index
    %c0_9 = arith.constant 0 : index
    %c0_10 = arith.constant 0 : index
    %10 = vector.load %arg2[%c0_8, %c1, %c0_9, %c0_10] : memref<1x4x2x128xf32, #tpu.memory_space<vmem>>, vector<1x1x2x128xf32>
    %11 = vector.shape_cast %10 : vector<1x1x2x128xf32> to vector<2x128xf32>
    %c0_11 = arith.constant 0 : index
    %c1_12 = arith.constant 1 : index
    %c0_13 = arith.constant 0 : index
    %c0_14 = arith.constant 0 : index
    %12 = vector.load %arg3[%c0_11, %c1_12, %c0_13, %c0_14] : memref<1x4x2x128xf32, #tpu.memory_space<vmem>>, vector<1x1x2x128xf32>
    %13 = vector.shape_cast %12 : vector<1x1x2x128xf32> to vector<2x128xf32>
    %14 = arith.mulf %11, %13 : vector<2x128xf32>
    %15 = arith.addf %7, %14 : vector<2x128xf32>
    %16 = arith.mulf %11, %11 : vector<2x128xf32>
    %17 = arith.addf %8, %16 : vector<2x128xf32>
    %18 = arith.mulf %13, %13 : vector<2x128xf32>
    %19 = arith.addf %9, %18 : vector<2x128xf32>
    %c0_15 = arith.constant 0 : index
    %c2 = arith.constant 2 : index
    %c0_16 = arith.constant 0 : index
    %c0_17 = arith.constant 0 : index
    %20 = vector.load %arg2[%c0_15, %c2, %c0_16, %c0_17] : memref<1x4x2x128xf32, #tpu.memory_space<vmem>>, vector<1x1x2x128xf32>
    %21 = vector.shape_cast %20 : vector<1x1x2x128xf32> to vector<2x128xf32>
    %c0_18 = arith.constant 0 : index
    %c2_19 = arith.constant 2 : index
    %c0_20 = arith.constant 0 : index
    %c0_21 = arith.constant 0 : index
    %22 = vector.load %arg3[%c0_18, %c2_19, %c0_20, %c0_21] : memref<1x4x2x128xf32, #tpu.memory_space<vmem>>, vector<1x1x2x128xf32>
    %23 = vector.shape_cast %22 : vector<1x1x2x128xf32> to vector<2x128xf32>
    %24 = arith.mulf %21, %23 : vector<2x128xf32>
    %25 = arith.addf %15, %24 : vector<2x128xf32>
    %26 = arith.mulf %21, %21 : vector<2x128xf32>
    %27 = arith.addf %17, %26 : vector<2x128xf32>
    %28 = arith.mulf %23, %23 : vector<2x128xf32>
    %29 = arith.addf %19, %28 : vector<2x128xf32>
    %c0_22 = arith.constant 0 : index
    %c3 = arith.constant 3 : index
    %c0_23 = arith.constant 0 : index
    %c0_24 = arith.constant 0 : index
    %30 = vector.load %arg2[%c0_22, %c3, %c0_23, %c0_24] : memref<1x4x2x128xf32, #tpu.memory_space<vmem>>, vector<1x1x2x128xf32>
    %31 = vector.shape_cast %30 : vector<1x1x2x128xf32> to vector<2x128xf32>
    %c0_25 = arith.constant 0 : index
    %c3_26 = arith.constant 3 : index
    %c0_27 = arith.constant 0 : index
    %c0_28 = arith.constant 0 : index
    %32 = vector.load %arg3[%c0_25, %c3_26, %c0_27, %c0_28] : memref<1x4x2x128xf32, #tpu.memory_space<vmem>>, vector<1x1x2x128xf32>
    %33 = vector.shape_cast %32 : vector<1x1x2x128xf32> to vector<2x128xf32>
    %34 = arith.mulf %31, %33 : vector<2x128xf32>
    %35 = arith.addf %25, %34 : vector<2x128xf32>
    %36 = arith.mulf %31, %31 : vector<2x128xf32>
    %37 = arith.addf %27, %36 : vector<2x128xf32>
    %38 = arith.mulf %33, %33 : vector<2x128xf32>
    %39 = arith.addf %29, %38 : vector<2x128xf32>
    %40 = arith.mulf %37, %39 : vector<2x128xf32>
    %cst = arith.constant 1.000000e-16 : f32
    %41 = vector.broadcast %cst : f32 to vector<2x128xf32>
    %42 = arith.maximumf %40, %41 : vector<2x128xf32>
    %43 = math.rsqrt %42 : vector<2x128xf32>
    %44 = arith.mulf %35, %43 : vector<2x128xf32>
    %cst_29 = arith.constant -1.000000e+00 : f32
    %cst_30 = arith.constant 1.000000e+00 : f32
    %45 = vector.broadcast %cst_29 : f32 to vector<2x128xf32>
    %46 = arith.maximumf %45, %44 : vector<2x128xf32>
    %47 = vector.broadcast %cst_30 : f32 to vector<2x128xf32>
    %48 = arith.minimumf %47, %46 : vector<2x128xf32>
    %cst_31 = arith.constant 1.000000e+00 : f32
    %49 = vector.broadcast %cst_31 : f32 to vector<2x128xf32>
    %50 = arith.subf %49, %48 : vector<2x128xf32>
    %51 = arith.mulf %50, %50 : vector<2x128xf32>
    %c0_32 = arith.constant 0 : index
    %c0_33 = arith.constant 0 : index
    %52 = vector.load %arg5[%c0_32, %c0_33] : memref<2x128xf32, #tpu.memory_space<vmem>>, vector<2x128xf32>
    %53 = arith.addf %52, %51 : vector<2x128xf32>
    %c0_34 = arith.constant 0 : index
    %c0_35 = arith.constant 0 : index
    %54 = vector.load %arg5[%c0_34, %c0_35] : memref<2x128xf32, #tpu.memory_space<vmem>>, vector<2x128xf32>
    tpu.vector_store %arg5[%c0_34, %c0_35], %53 {strides = array<i32>} : memref<2x128xf32, #tpu.memory_space<vmem>>, vector<2x128xf32>,
    %c0_i32_36 = arith.constant 0 : i32
    %55 = arith.cmpi eq, %arg1, %c0_i32_36 : i32
    %56 = arith.extui %55 : i1 to i32
    %c0_i32_37 = arith.constant 0 : i32
    %57 = arith.cmpi ne, %56, %c0_i32_37 : i32
    scf.if %57 {
      %c0_38 = arith.constant 0 : index
      %c0_39 = arith.constant 0 : index
      %58 = vector.load %arg5[%c0_38, %c0_39] : memref<2x128xf32, #tpu.memory_space<vmem>>, vector<2x128xf32>
      %cst_40 = arith.constant dense<0.000000e+00> : vector<128xf32>
      %59 = vector.multi_reduction <add>, %58, %cst_40 [0] : vector<2x128xf32> to vector<128xf32>
      %60 = vector.shape_cast %59 : vector<128xf32> to vector<1x128xf32>
      %c0_41 = arith.constant 0 : index
      %c0_42 = arith.constant 0 : index
      %c0_43 = arith.constant 0 : index
      %61 = vector.load %arg4[%c0_41, %c0_42, %c0_43] : memref<1x1x128xf32, #tpu.memory_space<vmem>>, vector<1x1x128xf32>
      %62 = vector.shape_cast %61 : vector<1x1x128xf32> to vector<1x128xf32>
      %63 = vector.shape_cast %60 : vector<1x128xf32> to vector<1x1x128xf32>
      tpu.vector_store %arg4[%c0_41, %c0_42, %c0_43], %63 {strides = array<i32>} : memref<1x1x128xf32, #tpu.memory_space<vmem>>, vector<1x1x128xf32>,
    } else {
    }
    return
  }
  func.func @transform_0(%arg0: i32, %arg1: i32) -> (i32, i32, i32, i32) {
    %c0_i32 = arith.constant 0 : i32
    %c0_i32_0 = arith.constant 0 : i32
    %c0_i32_1 = arith.constant 0 : i32
    return %arg0, %c0_i32, %arg1, %c0_i32_0 : i32, i32, i32, i32
  }
  func.func @transform_1(%arg0: i32, %arg1: i32) -> (i32, i32, i32, i32) {
    %c0_i32 = arith.constant 0 : i32
    %c0_i32_0 = arith.constant 0 : i32
    %c0_i32_1 = arith.constant 0 : i32
    return %arg0, %c0_i32, %arg1, %c0_i32_0 : i32, i32, i32, i32
  }
  func.func @transform_2(%arg0: i32, %arg1: i32) -> (i32, i32, i32) {
    %c0_i32 = arith.constant 0 : i32
    %c0_i32_0 = arith.constant 0 : i32
    %c0_i32_1 = arith.constant 0 : i32
    return %arg0, %c0_i32, %c0_i32_0 : i32, i32, i32
  }
}

</mosaic_0001>

<llo_original>
// kernel: tpu_custom_call.1
$region0: #{tpu_custom_call.1}
  #allocation0 [shape = 'u32[]', space=smem, size = 0x4, offset = 0x4, fixed_abs, tag = 'smem constant byte address 0x4 - core index']
  #allocation1 [shape = 'u32[72,128]{1,0:T(1,128)}', space=vmem, size = 0x9000, scoped, tag = 'internal scratch']
  #allocation2 [shape = 'f32[2,128]{1,0:T(2,128)}', space=vmem, size = 0x400, scoped, tag = 'scratch operand']
  %s0 = inlined_call_operand.hbm [shape: f32[2,4,2,128], index: 0, kind: input, shape index: {}]
  %s1 = inlined_call_operand.hbm [shape: f32[2,4,2,128], index: 1, kind: input, shape index: {}]
  %s2 = inlined_call_operand.hbm [shape: f32[2,1,128], index: 2, kind: output, shape index: {}]
  %s3 = sld [smem:[#allocation0]]
  $region57: #{tpu_custom_call.1} parent=0
    _
  %s5 = ssub.s32 1, %s3
  %s6 = scalar_select 0, %s5, %s3
  $region1: #{tpu_custom_call.1} parent=0
    #allocation3 [shape = 'u8[8192]{0}', space=vmem, size = 0x2000, scoped, tag = 'input window, operand 0']
    #allocation4 [shape = 's32[2]{0}', space=sflag, size = 0x8, scoped, tag = 'scoped memory for tpu_custom_call.1']
    #allocation5 [shape = 's32[2]{0}', space=sflag, size = 0x8, scoped, tag = 'scoped memory for tpu_custom_call.1']
    #allocation6 [shape = 'u8[8192]{0}', space=vmem, size = 0x2000, scoped, tag = 'input window, operand 1']
    #allocation7 [shape = 's32[2]{0}', space=sflag, size = 0x8, scoped, tag = 'scoped memory for tpu_custom_call.1']
    #allocation8 [shape = 'u8[1024]{0}', space=vmem, size = 0x400, scoped, tag = 'output window, operand 0']
    %7 = vsyncpa [#allocation4], 0
    %s8 = scalar_lea.sflag [#allocation4], 1
    %9 = vsyncpa %s8, 0
    %10 = vsyncpa [#allocation7], 0
    %s11 = scalar_lea.sflag [#allocation7], 1
    %12 = vsyncpa %s11, 0
    %13 = vsyncpa [#allocation5], 0
    %s14 = scalar_lea.sflag [#allocation5], 1
    %15 = vsyncpa %s14, 0
    loop: start=0, step=1, limit=4
    $region2: #{tpu_custom_call.1} parent=1 // loop_pre_header
      _
    $region3: #{tpu_custom_call.1} parent=1 // loop_header
      %s17 = sphi 0, %s21
      %p18 = scmp.ge.s32.totalorder %s17, 4
      %s24 = sphi 0, %s36
      %s25 = sphi 0, %s32
      %s26 = sphi 0, %s24
      %s27 = sphi 0, %s25
      %s28 = sphi 0, %s26
      %s29 = sphi 0, %s27
      %s41 = sphi 0, %s43
      %s44 = sphi 0, %s41
      %s45 = sphi 0, %s44
      %s61 = sphi 0, %s45
      %s69 = sphi 0, %s71
      %s72 = sphi 0, %s69
      %s73 = sphi 0, %s72
      %s89 = sphi 0, %s73
      %s95 = sphi 0, %s97
      %s98 = sphi 0, %s95
      %s99 = sphi 0, %s98
      %s115 = sphi 0, %s99
    $region4: #{tpu_custom_call.1} parent=1 // loop_header_branch
      %20 = sbr.rel (%p18) target = $region8
    $region5: #{tpu_custom_call.1} parent=1 // loop_body
      %s22 = ssub.s32 %s17, 1
      %s23 = ssub.s32 %s17, 2
      %s30 = sadd.s32 1, %s25
      %p31 = scmp.ge.s32.totalorder %s30, 1
      %s32 = scalar_select %p31, 0, %s30
      %s33 = sadd.s32 1, %s24
      %s34 = scalar_select %p31, %s33, %s24
      %p35 = scmp.ge.s32.totalorder %s34, 2
      %s36 = scalar_select %p35, 0, %s34
      %s37 = ssub.s32 %s24, %s36
      %s38 = ssub.s32 %s25, %s32
      %s39 = sor.u32 %s37, %s38
      %p40 = scmp.eq.s32.totalorder %s39, 0
      %s42 = sadd.s32 %s41, 1
      %s43 = scalar_select %p40, %s41, %s42
      %p46 = pneg %p40
      %p47 = scmp.eq.s32.totalorder %s17, 1
      %p48 = por %p46, %p47
      %p49 = scmp.ne.s32.totalorder %s41, %s44
      %p50 = scmp.eq.s32.totalorder %s17, 0
      %p51 = por %p49, %p50
      %p52 = scmp.ne.s32.totalorder %s41, %s44
      %p53 = scmp.eq.s32.totalorder %s22, 1
      %p54 = por %p52, %p53
      %p55 = scmp.ne.s32.totalorder %s44, %s45
      %p56 = scmp.eq.s32.totalorder %s22, 0
      %p57 = por %p55, %p56
      %p58 = scmp.ne.s32.totalorder %s44, %s45
      %p59 = scmp.eq.s32.totalorder %s23, 1
      %p60 = por %p58, %p59
      %p62 = scmp.ne.s32.totalorder %s45, %s61
      %p63 = scmp.eq.s32.totalorder %s23, 0
      %p64 = por %p62, %p63
      %s65 = ssub.s32 %s24, %s36
      %s66 = ssub.s32 %s25, %s32
      %s67 = sor.u32 %s65, %s66
      %p68 = scmp.eq.s32.totalorder %s67, 0
      %s70 = sadd.s32 %s69, 1
      %s71 = scalar_select %p68, %s69, %s70
      %p74 = pneg %p68
      %p75 = scmp.eq.s32.totalorder %s17, 1
      %p76 = por %p74, %p75
      %p77 = scmp.ne.s32.totalorder %s69, %s72
      %p78 = scmp.eq.s32.totalorder %s17, 0
      %p79 = por %p77, %p78
      %p80 = scmp.ne.s32.totalorder %s69, %s72
      %p81 = scmp.eq.s32.totalorder %s22, 1
      %p82 = por %p80, %p81
      %p83 = scmp.ne.s32.totalorder %s72, %s73
      %p84 = scmp.eq.s32.totalorder %s22, 0
      %p85 = por %p83, %p84
      %p86 = scmp.ne.s32.totalorder %s72, %s73
      %p87 = scmp.eq.s32.totalorder %s23, 1
      %p88 = por %p86, %p87
      %p90 = scmp.ne.s32.totalorder %s73, %s89
      %p91 = scmp.eq.s32.totalorder %s23, 0
      %p92 = por %p90, %p91
      %s93 = ssub.s32 %s24, %s36
      %p94 = scmp.eq.s32.totalorder %s93, 0
      %s96 = sadd.s32 %s95, 1
      %s97 = scalar_select %p94, %s95, %s96
      %p100 = pneg %p94
      %p101 = scmp.eq.s32.totalorder %s17, 1
      %p102 = por %p100, %p101
      %p103 = scmp.ne.s32.totalorder %s95, %s98
      %p104 = scmp.eq.s32.totalorder %s17, 0
      %p105 = por %p103, %p104
      %p106 = scmp.ne.s32.totalorder %s95, %s98
      %p107 = scmp.eq.s32.totalorder %s22, 1
      %p108 = por %p106, %p107
      %p109 = scmp.ne.s32.totalorder %s98, %s99
      %p110 = scmp.eq.s32.totalorder %s22, 0
      %p111 = por %p109, %p110
      %p112 = scmp.ne.s32.totalorder %s98, %s99
      %p113 = scmp.eq.s32.totalorder %s23, 1
      %p114 = por %p112, %p113
      %p116 = scmp.ne.s32.totalorder %s99, %s115
      %p117 = scmp.eq.s32.totalorder %s23, 0
      %p118 = por %p116, %p117
      %p119 = scmp.le.s32.totalorder 1, %s17
      %p120 = scmp.lt.s32.totalorder %s17, 3
      %p121 = pnand %p119, %p120
      %p122 = pneg %p121
      // Predicated region
      $region9: #{tpu_custom_call.1} parent=5 // pred_check
        _
      $region10: #{tpu_custom_call.1} parent=5 // pred_check_branch
        %124 = sbr.rel (%p121) target = $region12
      $region11: #{tpu_custom_call.1} parent=5 // pred_region
        %s125 = ssub.s32 %s17, 1
      $region12: #{tpu_custom_call.1} parent=5 // pred_fallthru
        _
      %p126 = scmp.lt.s32.totalorder %s17, 2
      // Predicated region
      $region13: #{tpu_custom_call.1} parent=5 // pred_check
        %p127 = pneg %p126
      $region14: #{tpu_custom_call.1} parent=5 // pred_check_branch
        %129 = sbr.rel (%p127) target = $region16
      $region15: #{tpu_custom_call.1} parent=5 // pred_region
        // Predicated region
        $region17: #{tpu_custom_call.1} parent=15 // pred_check
          %p130 = pneg %p51
        $region18: #{tpu_custom_call.1} parent=15 // pred_check_branch
          %132 = sbr.rel (%p130) target = $region20
        $region19: #{tpu_custom_call.1} parent=15 // pred_region
          %s133 = sand.u32 %s41, 1
          %s134 = scalar_lea.sflag [#allocation4], %s133
          %s135 = sand.u32 %s41, 1
          %s136 = smul.addr %s135, 8
          %s137 = scalar_lea.vmem [#allocation3], %s136
          %139 = vsyncadd %s134, 0
          %s140 = smul.addr %s24, 4
          %s141 = sadd.s32 %s25, %s140
          %s142 = smul.addr %s141, 2
          %s143 = scalar_lea.hbm %s0, %s142
          %s144 = sshll.u32 %s143, 4
          %s145 = int_to_ptr.hbm [resolvable:$true] %s144
          %s146 = sshll.u32 %s137, 4
          %s147 = int_to_ptr.vmem [resolvable:$true] %s146
          %152 = dma.hbm_to_vmem [thread:$0]  %s145, 128, %s147, %s134, 32, 32, 2
        $region20: #{tpu_custom_call.1} parent=15 // pred_fallthru
          _
        // Predicated region
        $region21: #{tpu_custom_call.1} parent=15 // pred_check
          %p153 = pneg %p79
        $region22: #{tpu_custom_call.1} parent=15 // pred_check_branch
          %155 = sbr.rel (%p153) target = $region24
        $region23: #{tpu_custom_call.1} parent=15 // pred_region
          %s156 = sand.u32 %s69, 1
          %s157 = scalar_lea.sflag [#allocation7], %s156
          %s158 = sand.u32 %s69, 1
          %s159 = smul.addr %s158, 8
          %s160 = scalar_lea.vmem [#allocation6], %s159
          %162 = vsyncadd %s157, 0
          %s163 = smul.addr %s24, 4
          %s164 = sadd.s32 %s25, %s163
          %s165 = smul.addr %s164, 2
          %s166 = scalar_lea.hbm %s1, %s165
          %s167 = sshll.u32 %s166, 4
          %s168 = int_to_ptr.hbm [resolvable:$true] %s167
          %s169 = sshll.u32 %s160, 4
          %s170 = int_to_ptr.vmem [resolvable:$true] %s169
          %175 = dma.hbm_to_vmem [thread:$0]  %s168, 128, %s170, %s157, 32, 32, 2
        $region24: #{tpu_custom_call.1} parent=15 // pred_fallthru
          _
      $region16: #{tpu_custom_call.1} parent=5 // pred_fallthru
        _
      %p176 = scmp.le.s32.totalorder 1, %s17
      %p177 = scmp.lt.s32.totalorder %s17, 3
      %p178 = pnand %p176, %p177
      %p179 = pneg %p178
      // Predicated region
      $region25: #{tpu_custom_call.1} parent=5 // pred_check
        _
      $region26: #{tpu_custom_call.1} parent=5 // pred_check_branch
        %181 = sbr.rel (%p178) target = $region28
      $region27: #{tpu_custom_call.1} parent=5 // pred_region
        %s182 = ssub.s32 %s17, 1
        %s183 = sand.u32 %s44, 1
        %s184 = scalar_lea.sflag [#allocation4], %s183
        %s185 = sand.u32 %s44, 1
        %s186 = smul.addr %s185, 8
        %s187 = scalar_lea.vmem [#allocation3], %s186
        // Predicated region
        $region29: #{tpu_custom_call.1} parent=27 // pred_check
          %p188 = pneg %p57
        $region30: #{tpu_custom_call.1} parent=27 // pred_check_branch
          %190 = sbr.rel (%p188) target = $region32
        $region31: #{tpu_custom_call.1} parent=27 // pred_region
          %192 = dma.done %s184, 128
        $region32: #{tpu_custom_call.1} parent=27 // pred_fallthru
          _
        %s193 = sand.u32 %s72, 1
        %s194 = scalar_lea.sflag [#allocation7], %s193
        %s195 = sand.u32 %s72, 1
        %s196 = smul.addr %s195, 8
        %s197 = scalar_lea.vmem [#allocation6], %s196
        // Predicated region
        $region33: #{tpu_custom_call.1} parent=27 // pred_check
          %p198 = pneg %p85
        $region34: #{tpu_custom_call.1} parent=27 // pred_check_branch
          %200 = sbr.rel (%p198) target = $region36
        $region35: #{tpu_custom_call.1} parent=27 // pred_region
          %202 = dma.done %s194, 128
        $region36: #{tpu_custom_call.1} parent=27 // pred_fallthru
          _
        %s203 = sand.u32 %s44, 1
        %s204 = scalar_lea.sflag [#allocation4], %s203
        %s205 = sand.u32 %s44, 1
        %s206 = smul.addr %s205, 8
        %s207 = scalar_lea.vmem [#allocation3], %s206
        %p208 = pneg %p57
        %p209 = pneg %p54
        %s210 = sand.u32 %s72, 1
        %s211 = scalar_lea.sflag [#allocation7], %s210
        %s212 = sand.u32 %s72, 1
        %s213 = smul.addr %s212, 8
        %s214 = scalar_lea.vmem [#allocation6], %s213
        %p215 = pneg %p85
        %p216 = pneg %p82
        %p217 = pneg %p111
        %p218 = pneg %p108
        %s219 = sand.u32 %s98, 1
        %s220 = scalar_lea.sflag [#allocation5], %s219
        %s221 = sand.u32 %s98, 1
        %s222 = scalar_lea.vmem [#allocation8], %s221
        %p223 = scmp.eq.s32.totalorder %s27, 0
        // Predicated region
        $region37: #{tpu_custom_call.1} parent=27 // pred_check
          %p224 = pneg %p223
        $region38: #{tpu_custom_call.1} parent=27 // pred_check_branch
          %226 = sbr.rel (%p224) target = $region40
        $region39: #{tpu_custom_call.1} parent=27 // pred_region
          %227 = vst [vmem:[#allocation2] sm:$0x3] 0.0
        $region40: #{tpu_custom_call.1} parent=27 // pred_fallthru
          _
        %v228 = vld [vmem:[%s187] sm:$0x3]
        %v229 = vld [vmem:[%s197] sm:$0x3]
        %v230 = vmul.f32 %v228, %v229
        %v231 = vmul.f32 %v228, %v228
        %v232 = vmul.f32 %v229, %v229
        %s233 = scalar_lea.vmem %s187, 2 [#allocation3]
        %v234 = vld [vmem:[%s233] sm:$0x3]
        %s235 = scalar_lea.vmem %s197, 2 [#allocation6]
        %v236 = vld [vmem:[%s235] sm:$0x3]
        %v237 = vmul.f32 %v234, %v236
        %v238 = vadd.f32 %v230, %v237
        %v239 = vmul.f32 %v234, %v234
        %v240 = vadd.f32 %v231, %v239
        %v241 = vmul.f32 %v236, %v236
        %v242 = vadd.f32 %v232, %v241
        %s243 = scalar_lea.vmem %s187, 4 [#allocation3]
        %v244 = vld [vmem:[%s243] sm:$0x3]
        %s245 = scalar_lea.vmem %s197, 4 [#allocation6]
        %v246 = vld [vmem:[%s245] sm:$0x3]
        %v247 = vmul.f32 %v244, %v246
        %v248 = vadd.f32 %v238, %v247
        %v249 = vmul.f32 %v244, %v244
        %v250 = vadd.f32 %v240, %v249
        %v251 = vmul.f32 %v246, %v246
        %v252 = vadd.f32 %v242, %v251
        %s253 = scalar_lea.vmem %s187, 6 [#allocation3]
        %v254 = vld [vmem:[%s253] sm:$0x3]
        %s255 = scalar_lea.vmem %s197, 6 [#allocation6]
        %v256 = vld [vmem:[%s255] sm:$0x3]
        %v257 = vmul.f32 %v254, %v256
        %v258 = vadd.f32 %v248, %v257
        %v259 = vmul.f32 %v254, %v254
        %v260 = vadd.f32 %v250, %v259
        %v261 = vmul.f32 %v256, %v256
        %v262 = vadd.f32 %v252, %v261
        %v263 = vmul.f32 %v260, %v262
        %v264 = vmax.f32 %v263, 1e-16
        %v265 = vrsqrt.pop %v264
        %v266 = vmul.f32 %v265, %v264
        %v267 = vmul.f32 %v266, %v265
        %v268 = vmul.f32 0.5, %v267
        %v269 = vsub.f32 1.5, %v268
        %v270 = vmul.f32 %v265, %v269
        %vm271 = vweird.f32 %v264
        %vm272 = vweird.f32 %v265
        %vm273 = vmor %vm271, %vm272
        %v274 = vsel %vm273, %v265, %v270
        %v275 = vmul.f32 %v258, %v274
        %v276 = vmax.f32 %v275, -1.0
        %v277 = vmin.f32 %v276, 1.0
        %v278 = vsub.f32 1.0, %v277
        %v279 = vmul.f32 %v278, %v278
        %v280 = vld [vmem:[#allocation2] sm:$0x3]
        %v281 = vadd.f32 %v280, %v279
        %282 = vst [vmem:[#allocation2] sm:$0x3] %v281
        // Predicated region
        $region41: #{tpu_custom_call.1} parent=27 // pred_check
          %p283 = pneg %p223
        $region42: #{tpu_custom_call.1} parent=27 // pred_check_branch
          %285 = sbr.rel (%p283) target = $region44
        $region43: #{tpu_custom_call.1} parent=27 // pred_region
          %v286 = vld [vmem:[#allocation2] sm:$0x3]
          %vm287 = vcmask 1041408
          %v288 = vsel %vm287, %v286, 0.0
          %v289 = vrot.slane %v288, 4
          %v290 = vadd.f32 %v288, %v289
          %v291 = vrot.slane %v290, 2
          %v292 = vadd.f32 %v290, %v291
          %v293 = vrot.slane %v292, 1
          %v294 = vadd.f32 %v292, %v293
          %295 = vst [vmem:[%s222] sm:$0x1] %v294
        $region44: #{tpu_custom_call.1} parent=27 // pred_fallthru
          _
        %s296 = sand.u32 %s98, 1
        %s297 = scalar_lea.sflag [#allocation5], %s296
        %s298 = sand.u32 %s98, 1
        %s299 = scalar_lea.vmem [#allocation8], %s298
        // Predicated region
        $region45: #{tpu_custom_call.1} parent=27 // pred_check
          %p300 = pneg %p108
        $region46: #{tpu_custom_call.1} parent=27 // pred_check_branch
          %302 = sbr.rel (%p300) target = $region48
        $region47: #{tpu_custom_call.1} parent=27 // pred_region
          %304 = vsyncadd %s297, 0
          %s305 = scalar_lea.hbm %s2, %s26
          %s307 = sshll.u32 %s299, 4
          %s308 = int_to_ptr.vmem [resolvable:$true] %s307
          %s309 = sshll.u32 %s305, 4
          %s310 = int_to_ptr.hbm [resolvable:$true] %s309
          %312 = dma.vmem_to_hbm [thread:$0]  %s308, 16, %s310, %s297
        $region48: #{tpu_custom_call.1} parent=27 // pred_fallthru
          _
      $region28: #{tpu_custom_call.1} parent=5 // pred_fallthru
        _
      %p313 = scmp.le.s32.totalorder 2, %s17
      // Predicated region
      $region49: #{tpu_custom_call.1} parent=5 // pred_check
        %p314 = pneg %p313
      $region50: #{tpu_custom_call.1} parent=5 // pred_check_branch
        %316 = sbr.rel (%p314) target = $region52
      $region51: #{tpu_custom_call.1} parent=5 // pred_region
        %s317 = ssub.s32 %s17, 2
        // Predicated region
        $region53: #{tpu_custom_call.1} parent=51 // pred_check
          %p318 = pneg %p114
        $region54: #{tpu_custom_call.1} parent=51 // pred_check_branch
          %320 = sbr.rel (%p318) target = $region56
        $region55: #{tpu_custom_call.1} parent=51 // pred_region
          %s321 = sand.u32 %s99, 1
          %s322 = scalar_lea.sflag [#allocation5], %s321
          %s323 = sand.u32 %s99, 1
          %s324 = scalar_lea.vmem [#allocation8], %s323
          %326 = dma.done %s322, 16
        $region56: #{tpu_custom_call.1} parent=51 // pred_fallthru
          _
      $region52: #{tpu_custom_call.1} parent=5 // pred_fallthru
        _
    $region6: #{tpu_custom_call.1} parent=1 // loop_footer
      %s21 = sadd.s32 1, %s17
    $region7: #{tpu_custom_call.1} parent=1 // loop_footer_branch
      %16 = sbr.rel target = $region3
    $region8: #{tpu_custom_call.1} parent=1 // loop_exit
      _
    %327 = vsyncpa [#allocation4], 1
    %s328 = scalar_lea.sflag [#allocation4], 1
    %329 = vsyncpa %s328, 1
    %330 = vsyncpa [#allocation7], 1
    %s331 = scalar_lea.sflag [#allocation7], 1
    %332 = vsyncpa %s331, 1
    %333 = vsyncpa [#allocation5], 1
    %s334 = scalar_lea.sflag [#allocation5], 1
    %335 = vsyncpa %s334, 1

</llo_original>
